<compile_context>
chip_gen: v6e
topology: v6e:2x2x1
jax: 0.10.0
libtpu: 0.0.40
codegen_flags: <defaults>
</compile_context>

<pallas_src>
import jax
import jax.numpy as jnp
from jax.experimental import pallas as pl
from jax.experimental.pallas import tpu as pltpu


def _round_up(x, m):
    return ((x + m - 1) // m) * m


def zinb_decoder_kernel(
    z_ref,
    w1_ref, b1_ref,
    w2_ref, b2_ref,
    w3_ref, b3_ref,
    ws_ref, bs_ref,            # scale head
    wd_ref, bd_ref,            # dropout head
    scale_ref, dropout_ref,
):
    f32 = jnp.float32
    bf16 = jnp.bfloat16

    # hidden = relu(fc1(z)); relu(fc2(.)); relu(fc3(.))   (bf16 MXU, f32 acc)
    h = jnp.dot(z_ref[...], w1_ref[...], preferred_element_type=f32) + b1_ref[...]
    h = jnp.maximum(h, 0.0)
    h = jnp.dot(h.astype(bf16), w2_ref[...], preferred_element_type=f32) + b2_ref[...]
    h = jnp.maximum(h, 0.0)
    h = jnp.dot(h.astype(bf16), w3_ref[...], preferred_element_type=f32) + b3_ref[...]
    h = jnp.maximum(h, 0.0).astype(bf16)

    # Dropout head: one MXU pass, stored directly (no intermediate copy).
    dropout_ref[...] = (
        jnp.dot(h, wd_ref[...], preferred_element_type=f32) + bd_ref[...]
    ).astype(dropout_ref.dtype)

    # Scale head: stable softmax computed in place in the output tile, so the
    # only live (tile_b, n_pad) f32 temporary is the logits themselves.
    logits = jnp.dot(h, ws_ref[...], preferred_element_type=f32) + bs_ref[...]
    m = jnp.max(logits, axis=-1, keepdims=True)
    scale_ref[...] = jnp.exp(logits - m).astype(scale_ref.dtype)
    denom = jnp.sum(scale_ref[...].astype(f32), axis=-1, keepdims=True)
    # Exact divide (not approx reciprocal): downstream ZINB likelihoods want
    # exact normalization and the kernel is writeback-bound, not VPU-bound.
    scale_ref[...] = (scale_ref[...].astype(f32) / denom).astype(scale_ref.dtype)


# ----------------------------------------------------------------------------
# Wrapper-side tiling / VMEM budgeting helpers.
# ----------------------------------------------------------------------------
_V7X_SAFE_BUDGET = 48 << 20       # leave slack under v7x's 64 MiB physical VMEM


def _vmem_estimate(tile_b, zdim, h_pads, n_pad, out_bytes):
    bf16_b, f32_b = 2, 4
    weights = (zdim * h_pads[0] + h_pads[0] * h_pads[1]
               + h_pads[1] * h_pads[2] + 2 * h_pads[2] * n_pad) * bf16_b
    biases = (sum(h_pads) + 2 * n_pad) * f32_b
    z_tiles = 2 * tile_b * zdim * bf16_b                     # double-buffered input
    out_tiles = 2 * tile_b * n_pad * (out_bytes[0] + out_bytes[1])  # 2x buffered outs
    live = tile_b * sum(h_pads) * f32_b + 2 * tile_b * n_pad * f32_b
    return weights + biases + z_tiles + out_tiles + live


def _choose_tile_b(batch, requested, zdim, h_pads, n_pad, out_bytes):
    tb = min(requested, _round_up(max(batch, 1), 8))
    # Give the second TensorCore (v7x megacore) work when the whole batch
    # would otherwise land in a single grid step.
    if batch >= 16 and -(-batch // tb) < 2:
        tb = _round_up(-(-batch // 2), 8)
    # Shrink until the working set fits a v7x-safe VMEM budget.
    while tb > 8 and _vmem_estimate(tb, zdim, h_pads, n_pad, out_bytes) > _V7X_SAFE_BUDGET:
        tb = max(_round_up(tb // 2, 8), 8)
    return max(tb, 8)


def zinb_decoder(z, params, *, tile_b=128,
                 scale_dtype=jnp.float32, dropout_dtype=jnp.float32):
    """z: (B, z_dim) f32. params: dict of (in, out)-layout weights (see init_params).

    Returns (scale, theta, dropout) matching the PyTorch ZINBDecoder.forward.
    scale_dtype / dropout_dtype may be set to jnp.bfloat16 to halve the
    dominant HBM writeback stream when downstream precision allows.
    """
    f32, bf16 = jnp.float32, jnp.bfloat16

    B, Z = z.shape
    H1 = params["w1"].shape[1]
    H2 = params["w2"].shape[1]
    H3, N = params["ws"].shape

    H1p, H2p, H3p = (_round_up(h, 128) for h in (H1, H2, H3))
    n_pad = _round_up(N, 128)
    out_bytes = (jnp.dtype(scale_dtype).itemsize, jnp.dtype(dropout_dtype).itemsize)

    tile_b = _choose_tile_b(B, tile_b, Z, (H1p, H2p, H3p), n_pad, out_bytes)
    n_steps = pl.cdiv(B, tile_b)
    b_pad = n_steps * tile_b

    # ---- parameter padding / packing (fused under jit) ---------------------
    def pad2(a, rows, cols, cval=0.0):
        r, c = a.shape
        return jnp.pad(a, ((0, rows - r), (0, cols - c)), constant_values=cval)

    # Zero padding of the hidden dims is exact through ReLU (pad columns have
    # zero weight & bias -> zero activation -> zero contribution downstream).
    w1 = pad2(params["w1"], Z,   H1p).astype(bf16)
    b1 = pad2(params["b1"], 1,   H1p).astype(f32)
    w2 = pad2(params["w2"], H1p, H2p).astype(bf16)
    b2 = pad2(params["b2"], 1,   H2p).astype(f32)
    w3 = pad2(params["w3"], H2p, H3p).astype(bf16)
    b3 = pad2(params["b3"], 1,   H3p).astype(f32)
    ws = pad2(params["ws"], H3p, n_pad).astype(bf16)
    # Scale-head pad bias is very negative so exp() of padded lanes is exactly
    # 0 in the f32 softmax (normalization over real lanes unaffected).
    bs = pad2(params["bs"], 1,   n_pad, cval=-1e30).astype(f32)
    wd = pad2(params["wd"], H3p, n_pad).astype(bf16)
    bd = pad2(params["bd"], 1,   n_pad).astype(f32)

    # Pad the batch up to a whole number of tiles (extra rows computed on
    # zeros and sliced off below).
    z_p = jnp.pad(z.astype(f32), ((0, b_pad - B), (0, 0))).astype(bf16)

    # Constant index_map + single buffering: weights stay VMEM-resident across
    # the whole grid without the default 2x double-buffer footprint.
    const = lambda shape: pl.BlockSpec(shape, lambda i: (0, 0),
                                       pipeline_mode=pl.Buffered(1))
    row = lambda d: pl.BlockSpec((tile_b, d), lambda i: (i, 0))   # batch-tiled

    vmem_limit = int(min(
        max(2 * _vmem_estimate(tile_b, Z, (H1p, H2p, H3p), n_pad, out_bytes)
            + (4 << 20), 32 << 20),
        128 << 20))

    scale_p, dropout_p = pl.pallas_call(
        zinb_decoder_kernel,
        grid=(n_steps,),
        in_specs=[
            row(Z),                                   # z tile
            const((Z, H1p)),   const((1, H1p)),
            const((H1p, H2p)), const((1, H2p)),
            const((H2p, H3p)), const((1, H3p)),
            const((H3p, n_pad)), const((1, n_pad)),   # scale head
            const((H3p, n_pad)), const((1, n_pad)),   # dropout head
        ],
        out_specs=(row(n_pad), row(n_pad)),
        out_shape=(
            jax.ShapeDtypeStruct((b_pad, n_pad), scale_dtype),
            jax.ShapeDtypeStruct((b_pad, n_pad), dropout_dtype),
        ),
        compiler_params=pltpu.CompilerParams(
            dimension_semantics=("parallel",),
            vmem_limit_bytes=vmem_limit,
        ),
    )(z_p, w1, b1, w2, b2, w3, b3, ws, bs, wd, bd)

    # theta depends only on parameters -> computed outside the kernel.
    theta = jnp.exp(params["log_theta"].astype(f32)).reshape(N)

    return scale_p[:B, :N], theta, dropout_p[:B, :N]


def init_params(key, z_dim, h1, h2, h3, n_input):
    """Deterministic synthetic parameters. Linear weights stored as (in, out)."""
    ks = jax.random.split(key, 11)

    def lin(kw, kb, fan_in, fan_out):
        bound = 1.0 / jnp.sqrt(fan_in)
        w = jax.random.uniform(kw, (fan_in, fan_out), jnp.float32, -bound, bound)
        b = jax.random.uniform(kb, (1, fan_out), jnp.float32, -bound, bound)
        return w, b

    w1, b1 = lin(ks[0], ks[1], z_dim, h1)
    w2, b2 = lin(ks[2], ks[3], h1, h2)
    w3, b3 = lin(ks[4], ks[5], h2, h3)
    ws, bs = lin(ks[6], ks[7], h3, n_input)
    wd, bd = lin(ks[8], ks[9], h3, n_input)
    log_theta = jax.random.normal(ks[10], (n_input,), jnp.float32)

    return dict(w1=w1, b1=b1, w2=w2, b2=b2, w3=w3, b3=b3,
                ws=ws, bs=bs, wd=wd, bd=bd, log_theta=log_theta)


def reference(z, p):
    """Pure-JAX reference mirroring the PyTorch forward with the same
    precision policy as the kernel (bf16 MXU operands, f32 accumulation)."""
    f32, bf16 = jnp.float32, jnp.bfloat16

    def dense(x, w, b):
        return jnp.dot(x.astype(bf16), w.astype(bf16),
                       preferred_element_type=f32) + b.astype(f32)

    h = jax.nn.relu(dense(z, p["w1"], p["b1"]))
    h = jax.nn.relu(dense(h, p["w2"], p["b2"]))
    h = jax.nn.relu(dense(h, p["w3"], p["b3"]))
    scale = jax.nn.softmax(dense(h, p["ws"], p["bs"]), axis=-1)
    theta = jnp.exp(p["log_theta"]).reshape(-1)
    dropout = dense(h, p["wd"], p["bd"])
    return scale, theta, dropout


if __name__ == "__main__":
    # Small shapes consistent with the module: z_dim=8, hidden dims 32/64/32,
    # n_input=128, batch=8 (tile_b adapts to 8 -> no wasted padded rows).
    B, Z, H1, H2, H3, N = 8, 8, 32, 64, 32, 128

    key = jax.random.PRNGKey(0)
    k_z, k_p = jax.random.split(key)
    z = jax.random.normal(k_z, (B, Z), jnp.float32)
    params = init_params(k_p, Z, H1, H2, H3, N)

    scale, theta, dropout = jax.jit(zinb_decoder)(z, params)
    jax.block_until_ready((scale, theta, dropout))

    # Sanity check against the pure-JAX reference.
    scale_r, theta_r, dropout_r = reference(z, params)
    assert scale.shape == (B, N) and theta.shape == (N,) and dropout.shape == (B, N)
    assert jnp.allclose(jnp.sum(scale, axis=-1), 1.0, atol=1e-3)
    assert jnp.allclose(scale, scale_r, atol=1e-4, rtol=1e-2)
    assert jnp.allclose(theta, theta_r, atol=1e-5, rtol=1e-5)
    assert jnp.allclose(dropout, dropout_r, atol=2e-3, rtol=2e-3)

    print("KERNEL_OK")
</pallas_src>

<mosaic_0001>
module attributes {stable_mosaic.version = 11 : i64} {
  func.func @zinb_decoder_kernel(%arg0: i32, %arg1: memref<8x8xbf16, #tpu.memory_space<vmem>>, %arg2: memref<8x128xbf16, #tpu.memory_space<vmem>>, %arg3: memref<1x128xf32, #tpu.memory_space<vmem>>, %arg4: memref<128x128xbf16, #tpu.memory_space<vmem>>, %arg5: memref<1x128xf32, #tpu.memory_space<vmem>>, %arg6: memref<128x128xbf16, #tpu.memory_space<vmem>>, %arg7: memref<1x128xf32, #tpu.memory_space<vmem>>, %arg8: memref<128x128xbf16, #tpu.memory_space<vmem>>, %arg9: memref<1x128xf32, #tpu.memory_space<vmem>>, %arg10: memref<128x128xbf16, #tpu.memory_space<vmem>>, %arg11: memref<1x128xf32, #tpu.memory_space<vmem>>, %arg12: memref<8x128xf32, #tpu.memory_space<vmem>>, %arg13: memref<8x128xf32, #tpu.memory_space<vmem>>) attributes {dimension_semantics = [#tpu.dimension_semantics<parallel>], iteration_bounds = array<i64: 1>, scalar_prefetch = 0 : i64, scratch_operands = 0 : i64, tpu.core_type = #tpu.core_type<tc>, window_params = [{transform_indices = @transform_0, window_bounds = array<i64: 8, 8>}, {pipeline_mode = #tpu.pipeline_mode<synchronous>, transform_indices = @transform_1, window_bounds = array<i64: 8, 128>}, {pipeline_mode = #tpu.pipeline_mode<synchronous>, transform_indices = @transform_2, window_bounds = array<i64: 1, 128>}, {pipeline_mode = #tpu.pipeline_mode<synchronous>, transform_indices = @transform_3, window_bounds = array<i64: 128, 128>}, {pipeline_mode = #tpu.pipeline_mode<synchronous>, transform_indices = @transform_4, window_bounds = array<i64: 1, 128>}, {pipeline_mode = #tpu.pipeline_mode<synchronous>, transform_indices = @transform_5, window_bounds = array<i64: 128, 128>}, {pipeline_mode = #tpu.pipeline_mode<synchronous>, transform_indices = @transform_6, window_bounds = array<i64: 1, 128>}, {pipeline_mode = #tpu.pipeline_mode<synchronous>, transform_indices = @transform_7, window_bounds = array<i64: 128, 128>}, {pipeline_mode = #tpu.pipeline_mode<synchronous>, transform_indices = @transform_8, window_bounds = array<i64: 1, 128>}, {pipeline_mode = #tpu.pipeline_mode<synchronous>, transform_indices = @transform_9, window_bounds = array<i64: 128, 128>}, {pipeline_mode = #tpu.pipeline_mode<synchronous>, transform_indices = @transform_10, window_bounds = array<i64: 1, 128>}, {transform_indices = @transform_11, window_bounds = array<i64: 8, 128>}, {transform_indices = @transform_12, window_bounds = array<i64: 8, 128>}]} {
    %c0 = arith.constant 0 : index
    %c0_0 = arith.constant 0 : index
    %0 = vector.load %arg1[%c0, %c0_0] : memref<8x8xbf16, #tpu.memory_space<vmem>>, vector<8x8xbf16>
    %c0_1 = arith.constant 0 : index
    %c0_2 = arith.constant 0 : index
    %1 = vector.load %arg2[%c0_1, %c0_2] : memref<8x128xbf16, #tpu.memory_space<vmem>>, vector<8x128xbf16>
    %cst = arith.constant dense<0.000000e+00> : vector<8x128xf32>
    %2 = tpu.matmul %0, %1, %cst {dimension_numbers = #tpu.dot_dimension_numbers<[1], [0], [0], [1], [0, 0, 1, 1], [], []>} : vector<8x8xbf16>, vector<8x128xbf16>, vector<8x128xf32> -> vector<8x128xf32>
    %c0_3 = arith.constant 0 : index
    %c0_4 = arith.constant 0 : index
    %3 = vector.load %arg3[%c0_3, %c0_4] : memref<1x128xf32, #tpu.memory_space<vmem>>, vector<1x128xf32>
    %4 = vector.broadcast %3 : vector<1x128xf32> to vector<8x128xf32>
    %5 = arith.addf %2, %4 : vector<8x128xf32>
    %cst_5 = arith.constant 0.000000e+00 : f32
    %6 = vector.broadcast %cst_5 : f32 to vector<8x128xf32>
    %7 = arith.maximumf %5, %6 : vector<8x128xf32>
    %8 = arith.truncf %7 : vector<8x128xf32> to vector<8x128xbf16>
    %c0_6 = arith.constant 0 : index
    %c0_7 = arith.constant 0 : index
    %9 = vector.load %arg4[%c0_6, %c0_7] : memref<128x128xbf16, #tpu.memory_space<vmem>>, vector<128x128xbf16>
    %cst_8 = arith.constant dense<0.000000e+00> : vector<8x128xf32>
    %10 = tpu.matmul %8, %9, %cst_8 {dimension_numbers = #tpu.dot_dimension_numbers<[1], [0], [0], [1], [0, 0, 1, 1], [], []>} : vector<8x128xbf16>, vector<128x128xbf16>, vector<8x128xf32> -> vector<8x128xf32>
    %c0_9 = arith.constant 0 : index
    %c0_10 = arith.constant 0 : index
    %11 = vector.load %arg5[%c0_9, %c0_10] : memref<1x128xf32, #tpu.memory_space<vmem>>, vector<1x128xf32>
    %12 = vector.broadcast %11 : vector<1x128xf32> to vector<8x128xf32>
    %13 = arith.addf %10, %12 : vector<8x128xf32>
    %cst_11 = arith.constant 0.000000e+00 : f32
    %14 = vector.broadcast %cst_11 : f32 to vector<8x128xf32>
    %15 = arith.maximumf %13, %14 : vector<8x128xf32>
    %16 = arith.truncf %15 : vector<8x128xf32> to vector<8x128xbf16>
    %c0_12 = arith.constant 0 : index
    %c0_13 = arith.constant 0 : index
    %17 = vector.load %arg6[%c0_12, %c0_13] : memref<128x128xbf16, #tpu.memory_space<vmem>>, vector<128x128xbf16>
    %cst_14 = arith.constant dense<0.000000e+00> : vector<8x128xf32>
    %18 = tpu.matmul %16, %17, %cst_14 {dimension_numbers = #tpu.dot_dimension_numbers<[1], [0], [0], [1], [0, 0, 1, 1], [], []>} : vector<8x128xbf16>, vector<128x128xbf16>, vector<8x128xf32> -> vector<8x128xf32>
    %c0_15 = arith.constant 0 : index
    %c0_16 = arith.constant 0 : index
    %19 = vector.load %arg7[%c0_15, %c0_16] : memref<1x128xf32, #tpu.memory_space<vmem>>, vector<1x128xf32>
    %20 = vector.broadcast %19 : vector<1x128xf32> to vector<8x128xf32>
    %21 = arith.addf %18, %20 : vector<8x128xf32>
    %cst_17 = arith.constant 0.000000e+00 : f32
    %22 = vector.broadcast %cst_17 : f32 to vector<8x128xf32>
    %23 = arith.maximumf %21, %22 : vector<8x128xf32>
    %24 = arith.truncf %23 : vector<8x128xf32> to vector<8x128xbf16>
    %c0_18 = arith.constant 0 : index
    %c0_19 = arith.constant 0 : index
    %25 = vector.load %arg10[%c0_18, %c0_19] : memref<128x128xbf16, #tpu.memory_space<vmem>>, vector<128x128xbf16>
    %cst_20 = arith.constant dense<0.000000e+00> : vector<8x128xf32>
    %26 = tpu.matmul %24, %25, %cst_20 {dimension_numbers = #tpu.dot_dimension_numbers<[1], [0], [0], [1], [0, 0, 1, 1], [], []>} : vector<8x128xbf16>, vector<128x128xbf16>, vector<8x128xf32> -> vector<8x128xf32>
    %c0_21 = arith.constant 0 : index
    %c0_22 = arith.constant 0 : index
    %27 = vector.load %arg11[%c0_21, %c0_22] : memref<1x128xf32, #tpu.memory_space<vmem>>, vector<1x128xf32>
    %28 = vector.broadcast %27 : vector<1x128xf32> to vector<8x128xf32>
    %29 = arith.addf %26, %28 : vector<8x128xf32>
    %c0_23 = arith.constant 0 : index
    %c0_24 = arith.constant 0 : index
    %30 = vector.load %arg13[%c0_23, %c0_24] : memref<8x128xf32, #tpu.memory_space<vmem>>, vector<8x128xf32>
    tpu.vector_store %arg13[%c0_23, %c0_24], %29 {strides = array<i32>} : memref<8x128xf32, #tpu.memory_space<vmem>>, vector<8x128xf32>,
    %c0_25 = arith.constant 0 : index
    %c0_26 = arith.constant 0 : index
    %31 = vector.load %arg8[%c0_25, %c0_26] : memref<128x128xbf16, #tpu.memory_space<vmem>>, vector<128x128xbf16>
    %cst_27 = arith.constant dense<0.000000e+00> : vector<8x128xf32>
    %32 = tpu.matmul %24, %31, %cst_27 {dimension_numbers = #tpu.dot_dimension_numbers<[1], [0], [0], [1], [0, 0, 1, 1], [], []>} : vector<8x128xbf16>, vector<128x128xbf16>, vector<8x128xf32> -> vector<8x128xf32>
    %c0_28 = arith.constant 0 : index
    %c0_29 = arith.constant 0 : index
    %33 = vector.load %arg9[%c0_28, %c0_29] : memref<1x128xf32, #tpu.memory_space<vmem>>, vector<1x128xf32>
    %34 = vector.broadcast %33 : vector<1x128xf32> to vector<8x128xf32>
    %35 = arith.addf %32, %34 : vector<8x128xf32>
    %cst_30 = arith.constant dense<0xFF800000> : vector<8xf32>
    %36 = vector.multi_reduction <maximumf>, %35, %cst_30 [1] : vector<8x128xf32> to vector<8xf32>
    %37 = vector.shape_cast %36 : vector<8xf32> to vector<8x1xf32>
    %38 = vector.broadcast %37 : vector<8x1xf32> to vector<8x128xf32>
    %39 = arith.subf %35, %38 : vector<8x128xf32>
    %40 = math.exp %39 : vector<8x128xf32>
    %c0_31 = arith.constant 0 : index
    %c0_32 = arith.constant 0 : index
    %41 = vector.load %arg12[%c0_31, %c0_32] : memref<8x128xf32, #tpu.memory_space<vmem>>, vector<8x128xf32>
    tpu.vector_store %arg12[%c0_31, %c0_32], %40 {strides = array<i32>} : memref<8x128xf32, #tpu.memory_space<vmem>>, vector<8x128xf32>,
    %c0_33 = arith.constant 0 : index
    %c0_34 = arith.constant 0 : index
    %42 = vector.load %arg12[%c0_33, %c0_34] : memref<8x128xf32, #tpu.memory_space<vmem>>, vector<8x128xf32>
    %cst_35 = arith.constant dense<0.000000e+00> : vector<8xf32>
    %43 = vector.multi_reduction <add>, %42, %cst_35 [1] : vector<8x128xf32> to vector<8xf32>
    %44 = vector.shape_cast %43 : vector<8xf32> to vector<8x1xf32>
    %c0_36 = arith.constant 0 : index
    %c0_37 = arith.constant 0 : index
    %45 = vector.load %arg12[%c0_36, %c0_37] : memref<8x128xf32, #tpu.memory_space<vmem>>, vector<8x128xf32>
    %46 = vector.broadcast %44 : vector<8x1xf32> to vector<8x128xf32>
    %47 = arith.divf %45, %46 : vector<8x128xf32>
    %c0_38 = arith.constant 0 : index
    %c0_39 = arith.constant 0 : index
    %48 = vector.load %arg12[%c0_38, %c0_39] : memref<8x128xf32, #tpu.memory_space<vmem>>, vector<8x128xf32>
    tpu.vector_store %arg12[%c0_38, %c0_39], %47 {strides = array<i32>} : memref<8x128xf32, #tpu.memory_space<vmem>>, vector<8x128xf32>,
    return
  }
  func.func @transform_0(%arg0: i32) -> (i32, i32) {
    %c0_i32 = arith.constant 0 : i32
    %c0_i32_0 = arith.constant 0 : i32
    return %arg0, %c0_i32 : i32, i32
  }
  func.func @transform_1(%arg0: i32) -> (i32, i32) {
    %c0_i32 = arith.constant 0 : i32
    %c0_i32_0 = arith.constant 0 : i32
    %c0_i32_1 = arith.constant 0 : i32
    return %c0_i32, %c0_i32_0 : i32, i32
  }
  func.func @transform_2(%arg0: i32) -> (i32, i32) {
    %c0_i32 = arith.constant 0 : i32
    %c0_i32_0 = arith.constant 0 : i32
    %c0_i32_1 = arith.constant 0 : i32
    return %c0_i32, %c0_i32_0 : i32, i32
  }
  func.func @transform_3(%arg0: i32) -> (i32, i32) {
    %c0_i32 = arith.constant 0 : i32
    %c0_i32_0 = arith.constant 0 : i32
    %c0_i32_1 = arith.constant 0 : i32
    return %c0_i32, %c0_i32_0 : i32, i32
  }
  func.func @transform_4(%arg0: i32) -> (i32, i32) {
    %c0_i32 = arith.constant 0 : i32
    %c0_i32_0 = arith.constant 0 : i32
    %c0_i32_1 = arith.constant 0 : i32
    return %c0_i32, %c0_i32_0 : i32, i32
  }
  func.func @transform_5(%arg0: i32) -> (i32, i32) {
    %c0_i32 = arith.constant 0 : i32
    %c0_i32_0 = arith.constant 0 : i32
    %c0_i32_1 = arith.constant 0 : i32
    return %c0_i32, %c0_i32_0 : i32, i32
  }
  func.func @transform_6(%arg0: i32) -> (i32, i32) {
    %c0_i32 = arith.constant 0 : i32
    %c0_i32_0 = arith.constant 0 : i32
    %c0_i32_1 = arith.constant 0 : i32
    return %c0_i32, %c0_i32_0 : i32, i32
  }
  func.func @transform_7(%arg0: i32) -> (i32, i32) {
    %c0_i32 = arith.constant 0 : i32
    %c0_i32_0 = arith.constant 0 : i32
    %c0_i32_1 = arith.constant 0 : i32
    return %c0_i32, %c0_i32_0 : i32, i32
  }
  func.func @transform_8(%arg0: i32) -> (i32, i32) {
    %c0_i32 = arith.constant 0 : i32
    %c0_i32_0 = arith.constant 0 : i32
    %c0_i32_1 = arith.constant 0 : i32
    return %c0_i32, %c0_i32_0 : i32, i32
  }
  func.func @transform_9(%arg0: i32) -> (i32, i32) {
    %c0_i32 = arith.constant 0 : i32
    %c0_i32_0 = arith.constant 0 : i32
    %c0_i32_1 = arith.constant 0 : i32
    return %c0_i32, %c0_i32_0 : i32, i32
  }
  func.func @transform_10(%arg0: i32) -> (i32, i32) {
    %c0_i32 = arith.constant 0 : i32
    %c0_i32_0 = arith.constant 0 : i32
    %c0_i32_1 = arith.constant 0 : i32
    return %c0_i32, %c0_i32_0 : i32, i32
  }
  func.func @transform_11(%arg0: i32) -> (i32, i32) {
    %c0_i32 = arith.constant 0 : i32
    %c0_i32_0 = arith.constant 0 : i32
    return %arg0, %c0_i32 : i32, i32
  }
  func.func @transform_12(%arg0: i32) -> (i32, i32) {
    %c0_i32 = arith.constant 0 : i32
    %c0_i32_0 = arith.constant 0 : i32
    return %arg0, %c0_i32 : i32, i32
  }
}

</mosaic_0001>

<llo_original>
// kernel: zinb_decoder.1
$region0: #{zinb_decoder.1}
  #allocation0 [shape = 'u32[]', space=smem, size = 0x4, offset = 0x4, fixed_abs, tag = 'smem constant byte address 0x4 - core index']
  #allocation1 [shape = 'u32[144,128]{1,0:T(1,128)}', space=vmem, size = 0x12000, scoped, tag = 'internal scratch']
  %s0 = inlined_call_operand.vmem [shape: bf16[8,8], index: 0, kind: input, shape index: {}]
  %s1 = inlined_call_operand.vmem [shape: bf16[8,128], index: 1, kind: input, shape index: {}]
  %s2 = inlined_call_operand.vmem [shape: f32[1,128], index: 2, kind: input, shape index: {}]
  %s3 = inlined_call_operand.vmem [shape: bf16[128,128], index: 3, kind: input, shape index: {}]
  %s4 = inlined_call_operand.vmem [shape: f32[1,128], index: 4, kind: input, shape index: {}]
  %s5 = inlined_call_operand.vmem [shape: bf16[128,128], index: 5, kind: input, shape index: {}]
  %s6 = inlined_call_operand.vmem [shape: f32[1,128], index: 6, kind: input, shape index: {}]
  %s7 = inlined_call_operand.vmem [shape: bf16[128,128], index: 7, kind: input, shape index: {}]
  %s8 = inlined_call_operand.vmem [shape: f32[1,128], index: 8, kind: input, shape index: {}]
  %s9 = inlined_call_operand.vmem [shape: bf16[128,128], index: 9, kind: input, shape index: {}]
  %s10 = inlined_call_operand.vmem [shape: f32[1,128], index: 10, kind: input, shape index: {}]
  %s11 = inlined_call_operand.hbm [shape: f32[8,128], index: 11, kind: output, shape index: {0}]
  %s12 = inlined_call_operand.hbm [shape: f32[8,128], index: 12, kind: output, shape index: {1}]
  %13 = xla_tuple %s11, %s12
  %s14 = sld [smem:[#allocation0]]
  $region62: #{zinb_decoder.1} parent=0
    _
  %s16 = ssub.s32 1, %s14
  %s17 = scalar_select 0, %s16, %s14
  $region1: #{zinb_decoder.1} parent=0
    #allocation2 [shape = 'u8[4096]{0}', space=vmem, size = 0x1000, scoped, tag = 'output window, operand 0, single buffered']
    #allocation3 [shape = 's32[1]{0}', space=sflag, size = 0x4, scoped, tag = 'scoped memory for zinb_decoder.1']
    #allocation4 [shape = 'u8[4096]{0}', space=vmem, size = 0x1000, scoped, tag = 'output window, operand 1, single buffered']
    #allocation5 [shape = 's32[1]{0}', space=sflag, size = 0x4, scoped, tag = 'scoped memory for zinb_decoder.1']
    %18 = vsyncpa [#allocation3], 0
    %19 = vsyncpa [#allocation5], 0
    // Predicated region
    $region2: #{zinb_decoder.1} parent=1 // pred_check
      _
    $region3: #{zinb_decoder.1} parent=1 // pred_check_branch
      %21 = sbr.rel (0) target = $region5
    $region4: #{zinb_decoder.1} parent=1 // pred_region
      _
    $region5: #{zinb_decoder.1} parent=1 // pred_fallthru
      _
    // Predicated region
    $region6: #{zinb_decoder.1} parent=1 // pred_check
      _
    $region7: #{zinb_decoder.1} parent=1 // pred_check_branch
      %23 = sbr.rel (0) target = $region9
    $region8: #{zinb_decoder.1} parent=1 // pred_region
      _
    $region9: #{zinb_decoder.1} parent=1 // pred_fallthru
      _
    // Predicated region
    $region10: #{zinb_decoder.1} parent=1 // pred_check
      _
    $region11: #{zinb_decoder.1} parent=1 // pred_check_branch
      %25 = sbr.rel (0) target = $region13
    $region12: #{zinb_decoder.1} parent=1 // pred_region
      _
    $region13: #{zinb_decoder.1} parent=1 // pred_fallthru
      _
    // Predicated region
    $region14: #{zinb_decoder.1} parent=1 // pred_check
      _
    $region15: #{zinb_decoder.1} parent=1 // pred_check_branch
      %27 = sbr.rel (0) target = $region17
    $region16: #{zinb_decoder.1} parent=1 // pred_region
      _
    $region17: #{zinb_decoder.1} parent=1 // pred_fallthru
      _
    // Predicated region
    $region18: #{zinb_decoder.1} parent=1 // pred_check
      _
    $region19: #{zinb_decoder.1} parent=1 // pred_check_branch
      %29 = sbr.rel (0) target = $region21
    $region20: #{zinb_decoder.1} parent=1 // pred_region
      _
    $region21: #{zinb_decoder.1} parent=1 // pred_fallthru
      _
    // Predicated region
    $region22: #{zinb_decoder.1} parent=1 // pred_check
      _
    $region23: #{zinb_decoder.1} parent=1 // pred_check_branch
      %31 = sbr.rel (0) target = $region25
    $region24: #{zinb_decoder.1} parent=1 // pred_region
      _
    $region25: #{zinb_decoder.1} parent=1 // pred_fallthru
      _
    // Predicated region
    $region26: #{zinb_decoder.1} parent=1 // pred_check
      _
    $region27: #{zinb_decoder.1} parent=1 // pred_check_branch
      %33 = sbr.rel (0) target = $region29
    $region28: #{zinb_decoder.1} parent=1 // pred_region
      _
    $region29: #{zinb_decoder.1} parent=1 // pred_fallthru
      _
    // Predicated region
    $region30: #{zinb_decoder.1} parent=1 // pred_check
      _
    $region31: #{zinb_decoder.1} parent=1 // pred_check_branch
      %35 = sbr.rel (0) target = $region33
    $region32: #{zinb_decoder.1} parent=1 // pred_region
      _
    $region33: #{zinb_decoder.1} parent=1 // pred_fallthru
      _
    // Predicated region
    $region34: #{zinb_decoder.1} parent=1 // pred_check
      _
    $region35: #{zinb_decoder.1} parent=1 // pred_check_branch
      %37 = sbr.rel (0) target = $region37
    $region36: #{zinb_decoder.1} parent=1 // pred_region
      _
    $region37: #{zinb_decoder.1} parent=1 // pred_fallthru
      _
    // Predicated region
    $region38: #{zinb_decoder.1} parent=1 // pred_check
      _
    $region39: #{zinb_decoder.1} parent=1 // pred_check_branch
      %39 = sbr.rel (0) target = $region41
    $region40: #{zinb_decoder.1} parent=1 // pred_region
      _
    $region41: #{zinb_decoder.1} parent=1 // pred_fallthru
      _
    // Predicated region
    $region42: #{zinb_decoder.1} parent=1 // pred_check
      _
    $region43: #{zinb_decoder.1} parent=1 // pred_check_branch
      %41 = sbr.rel (0) target = $region45
    $region44: #{zinb_decoder.1} parent=1 // pred_region
      _
    $region45: #{zinb_decoder.1} parent=1 // pred_fallthru
      _
    %v43 = vld [vmem:[%s0] sm:$0xf]
    %v44 = vld [vmem:[%s1] sm:$0xf]
    %v45 = vld [vmem:[%s2] sm:$0x1]
    %v47 = vlaneseq
    %v48 = vshrl.u32 %v47, 7
    %v49 = vsub.s32 0, %v48
    %v50 = vrot.slane %v45, %v49
    %vm52 = vcmask 64512
    %v54 = vsel %vm52, %v43, 0
    %vm56 = vcmask 1043456
    %v58 = vsel %vm56, %v44, 0
    %60 = vmatprep.subr.bf16.mxu0 0
    %61 = vmatpush1.bf16.msra.mxu0 0
    %62 = vmatprep.subr.bf16.mxu0 0
    %63 = vmatpush1.bf16.msra.mxu0 0
    %64 = vmatprep.subr.bf16.mxu0 0
    %65 = vmatpush1.bf16.msra.mxu0 0
    %66 = vmatprep.subr.bf16.mxu0 0
    %67 = vmatpush1.bf16.msra.mxu0 0
    %68 = vmatprep.subr.bf16.mxu0 0
    %69 = vmatpush1.bf16.msra.mxu0 0
    %70 = vmatprep.subr.bf16.mxu0 0
    %71 = vmatpush1.bf16.msra.mxu0 0
    %72 = vmatprep.subr.bf16.mxu0 0
    %73 = vmatpush1.bf16.msra.mxu0 0
    %74 = vmatprep.subr.bf16.mxu0 0
    %75 = vmatpush1.bf16.msra.mxu0 %v58
    %76 = vmatprep.subr.bf16.mxu0 0
    %77 = vmatpush2.bf16.msra.mxu0 0
    %78 = vmatprep.subr.bf16.mxu0 0
    %79 = vmatpush2.bf16.msra.mxu0 0
    %80 = vmatprep.subr.bf16.mxu0 0
    %81 = vmatpush2.bf16.msra.mxu0 0
    %82 = vmatprep.subr.bf16.mxu0 0
    %83 = vmatpush2.bf16.msra.mxu0 0
    %84 = vmatprep.subr.bf16.mxu0 0
    %85 = vmatpush2.bf16.msra.mxu0 0
    %86 = vmatprep.subr.bf16.mxu0 0
    %87 = vmatpush2.bf16.msra.mxu0 0
    %88 = vmatprep.subr.bf16.mxu0 0
    %89 = vmatpush2.bf16.msra.mxu0 0
    %90 = vmatprep.subr.bf16.mxu0 0
    %91 = vmatpush2.bf16.msra.mxu0 0
    %92 = vmatprep.mubr.bf16.mxu0 0
    %93 = vmatmul.mubr.bf16.gmra.mxu0 %v54
    %v94 = vpop.f32.mrf.mxu0
    %v95 = vadd.f32 %v50, %v94
    %v96 = vpop.f32.mrf.mxu0
    %v97 = vpop.f32.mrf.mxu0
    %v98 = vpop.f32.mrf.mxu0
    %99 = vdwg.mxu0
    %v100 = vmax.f32 %v95, 0.0
    %v101 = vpack.c.bf16 %v100, %v100
    %v102 = vld [vmem:[%s3] sm:$0xf]
    %v103 = vld [vmem:[%s3 + $0x4] sm:$0xf]
    %v104 = vld [vmem:[%s3 + $0x8] sm:$0xf]
    %v105 = vld [vmem:[%s3 + $0xc] sm:$0xf]
    %v106 = vld [vmem:[%s3 + $0x10] sm:$0xf]
    %v107 = vld [vmem:[%s3 + $0x14] sm:$0xf]
    %v108 = vld [vmem:[%s3 + $0x18] sm:$0xf]
    %v109 = vld [vmem:[%s3 + $0x1c] sm:$0xf]
    %v110 = vld [vmem:[%s3 + $0x20] sm:$0xf]
    %v111 = vld [vmem:[%s3 + $0x24] sm:$0xf]
    %v112 = vld [vmem:[%s3 + $0x28] sm:$0xf]
    %v113 = vld [vmem:[%s3 + $0x2c] sm:$0xf]
    %v114 = vld [vmem:[%s3 + $0x30] sm:$0xf]
    %v115 = vld [vmem:[%s3 + $0x34] sm:$0xf]
    %v116 = vld [vmem:[%s3 + $0x38] sm:$0xf]
    %v117 = vld [vmem:[%s3 + $0x3c] sm:$0xf]
    %v118 = vld [vmem:[%s4] sm:$0x1]
    %v120 = vlaneseq
    %v121 = vshrl.u32 %v120, 7
    %v122 = vsub.s32 0, %v121
    %v123 = vrot.slane %v118, %v122
    %v141 = vunpack.c.l.b16 %v102
    %v142 = vunpack.c.l.b16 %v103
    %v143 = vunpack.c.l.b16 %v104
    %v144 = vunpack.c.l.b16 %v105
    %v145 = vunpack.c.l.b16 %v106
    %v146 = vunpack.c.l.b16 %v107
    %v147 = vunpack.c.l.b16 %v108
    %v148 = vunpack.c.l.b16 %v109
    %v149 = vunpack.c.l.b16 %v110
    %v150 = vunpack.c.l.b16 %v111
    %v151 = vunpack.c.l.b16 %v112
    %v152 = vunpack.c.l.b16 %v113
    %v153 = vunpack.c.l.b16 %v114
    %v154 = vunpack.c.l.b16 %v115
    %v155 = vunpack.c.l.b16 %v116
    %v156 = vunpack.c.l.b16 %v117
    %v157 = vpack.c.b16 %v142, %v141
    %v158 = vpack.c.b16 %v144, %v143
    %v159 = vpack.c.b16 %v146, %v145
    %v160 = vpack.c.b16 %v148, %v147
    %v161 = vpack.c.b16 %v150, %v149
    %v162 = vpack.c.b16 %v152, %v151
    %v163 = vpack.c.b16 %v154, %v153
    %v164 = vpack.c.b16 %v156, %v155
    %173 = vmatprep.subr.bf16.mxu0 0
    %174 = vmatpush1.bf16.msra.mxu0 %v164
    %175 = vmatprep.subr.bf16.mxu0 0
    %176 = vmatpush1.bf16.msra.mxu0 %v163
    %177 = vmatprep.subr.bf16.mxu0 0
    %178 = vmatpush1.bf16.msra.mxu0 %v162
    %179 = vmatprep.subr.bf16.mxu0 0
    %180 = vmatpush1.bf16.msra.mxu0 %v161
    %181 = vmatprep.subr.bf16.mxu0 0
    %182 = vmatpush1.bf16.msra.mxu0 %v160
    %183 = vmatprep.subr.bf16.mxu0 0
    %184 = vmatpush1.bf16.msra.mxu0 %v159
    %185 = vmatprep.subr.bf16.mxu0 0
    %186 = vmatpush1.bf16.msra.mxu0 %v158
    %187 = vmatprep.subr.bf16.mxu0 0
    %188 = vmatpush1.bf16.msra.mxu0 %v157
    %189 = vmatprep.subr.bf16.mxu0 0
    %190 = vmatpush2.bf16.msra.mxu0 0
    %191 = vmatprep.subr.bf16.mxu0 0
    %192 = vmatpush2.bf16.msra.mxu0 0
    %193 = vmatprep.subr.bf16.mxu0 0
    %194 = vmatpush2.bf16.msra.mxu0 0
    %195 = vmatprep.subr.bf16.mxu0 0
    %196 = vmatpush2.bf16.msra.mxu0 0
    %197 = vmatprep.subr.bf16.mxu0 0
    %198 = vmatpush2.bf16.msra.mxu0 0
    %199 = vmatprep.subr.bf16.mxu0 0
    %200 = vmatpush2.bf16.msra.mxu0 0
    %201 = vmatprep.subr.bf16.mxu0 0
    %202 = vmatpush2.bf16.msra.mxu0 0
    %203 = vmatprep.subr.bf16.mxu0 0
    %204 = vmatpush2.bf16.msra.mxu0 0
    %205 = vmatprep.mubr.bf16.mxu0 0
    %206 = vmatmul.mubr.bf16.gmra.mxu0 %v101
    %v207 = vpop.f32.mrf.mxu0
    %v208 = vadd.f32 %v123, %v207
    %v209 = vpop.f32.mrf.mxu0
    %v210 = vpop.f32.mrf.mxu0
    %v211 = vpop.f32.mrf.mxu0
    %212 = vdwg.mxu0
    %v213 = vmax.f32 %v208, 0.0
    %v214 = vpack.c.bf16 %v213, %v213
    %v215 = vld [vmem:[%s5] sm:$0xf]
    %v216 = vld [vmem:[%s5 + $0x4] sm:$0xf]
    %v217 = vld [vmem:[%s5 + $0x8] sm:$0xf]
    %v218 = vld [vmem:[%s5 + $0xc] sm:$0xf]
    %v219 = vld [vmem:[%s5 + $0x10] sm:$0xf]
    %v220 = vld [vmem:[%s5 + $0x14] sm:$0xf]
    %v221 = vld [vmem:[%s5 + $0x18] sm:$0xf]
    %v222 = vld [vmem:[%s5 + $0x1c] sm:$0xf]
    %v223 = vld [vmem:[%s5 + $0x20] sm:$0xf]
    %v224 = vld [vmem:[%s5 + $0x24] sm:$0xf]
    %v225 = vld [vmem:[%s5 + $0x28] sm:$0xf]
    %v226 = vld [vmem:[%s5 + $0x2c] sm:$0xf]
    %v227 = vld [vmem:[%s5 + $0x30] sm:$0xf]
    %v228 = vld [vmem:[%s5 + $0x34] sm:$0xf]
    %v229 = vld [vmem:[%s5 + $0x38] sm:$0xf]
    %v230 = vld [vmem:[%s5 + $0x3c] sm:$0xf]
    %v231 = vld [vmem:[%s6] sm:$0x1]
    %v233 = vlaneseq
    %v234 = vshrl.u32 %v233, 7
    %v235 = vsub.s32 0, %v234
    %v236 = vrot.slane %v231, %v235
    %v254 = vunpack.c.l.b16 %v215
    %v255 = vunpack.c.l.b16 %v216
    %v256 = vunpack.c.l.b16 %v217
    %v257 = vunpack.c.l.b16 %v218
    %v258 = vunpack.c.l.b16 %v219
    %v259 = vunpack.c.l.b16 %v220
    %v260 = vunpack.c.l.b16 %v221
    %v261 = vunpack.c.l.b16 %v222
    %v262 = vunpack.c.l.b16 %v223
    %v263 = vunpack.c.l.b16 %v224
    %v264 = vunpack.c.l.b16 %v225
    %v265 = vunpack.c.l.b16 %v226
    %v266 = vunpack.c.l.b16 %v227
    %v267 = vunpack.c.l.b16 %v228
    %v268 = vunpack.c.l.b16 %v229
    %v269 = vunpack.c.l.b16 %v230
    %v270 = vpack.c.b16 %v255, %v254
    %v271 = vpack.c.b16 %v257, %v256
    %v272 = vpack.c.b16 %v259, %v258
    %v273 = vpack.c.b16 %v261, %v260
    %v274 = vpack.c.b16 %v263, %v262
    %v275 = vpack.c.b16 %v265, %v264
    %v276 = vpack.c.b16 %v267, %v266
    %v277 = vpack.c.b16 %v269, %v268
    %286 = vmatprep.subr.bf16.mxu0 0
    %287 = vmatpush1.bf16.msra.mxu0 %v277
    %288 = vmatprep.subr.bf16.mxu0 0
    %289 = vmatpush1.bf16.msra.mxu0 %v276
    %290 = vmatprep.subr.bf16.mxu0 0
    %291 = vmatpush1.bf16.msra.mxu0 %v275
    %292 = vmatprep.subr.bf16.mxu0 0
    %293 = vmatpush1.bf16.msra.mxu0 %v274
    %294 = vmatprep.subr.bf16.mxu0 0
    %295 = vmatpush1.bf16.msra.mxu0 %v273
    %296 = vmatprep.subr.bf16.mxu0 0
    %297 = vmatpush1.bf16.msra.mxu0 %v272
    %298 = vmatprep.subr.bf16.mxu0 0
    %299 = vmatpush1.bf16.msra.mxu0 %v271
    %300 = vmatprep.subr.bf16.mxu0 0
    %301 = vmatpush1.bf16.msra.mxu0 %v270
    %302 = vmatprep.subr.bf16.mxu0 0
    %303 = vmatpush2.bf16.msra.mxu0 0
    %304 = vmatprep.subr.bf16.mxu0 0
    %305 = vmatpush2.bf16.msra.mxu0 0
    %306 = vmatprep.subr.bf16.mxu0 0
    %307 = vmatpush2.bf16.msra.mxu0 0
    %308 = vmatprep.subr.bf16.mxu0 0
    %309 = vmatpush2.bf16.msra.mxu0 0
    %310 = vmatprep.subr.bf16.mxu0 0
    %311 = vmatpush2.bf16.msra.mxu0 0
    %312 = vmatprep.subr.bf16.mxu0 0
    %313 = vmatpush2.bf16.msra.mxu0 0
    %314 = vmatprep.subr.bf16.mxu0 0
    %315 = vmatpush2.bf16.msra.mxu0 0
    %316 = vmatprep.subr.bf16.mxu0 0
    %317 = vmatpush2.bf16.msra.mxu0 0
    %318 = vmatprep.mubr.bf16.mxu0 0
    %319 = vmatmul.mubr.bf16.gmra.mxu0 %v214
    %v320 = vpop.f32.mrf.mxu0
    %v321 = vadd.f32 %v236, %v320
    %v322 = vpop.f32.mrf.mxu0
    %v323 = vpop.f32.mrf.mxu0
    %v324 = vpop.f32.mrf.mxu0
    %325 = vdwg.mxu0
    %v326 = vmax.f32 %v321, 0.0
    %v327 = vpack.c.bf16 %v326, %v326
    %v328 = vld [vmem:[%s9] sm:$0xf]
    %v329 = vld [vmem:[%s9 + $0x4] sm:$0xf]
    %v330 = vld [vmem:[%s9 + $0x8] sm:$0xf]
    %v331 = vld [vmem:[%s9 + $0xc] sm:$0xf]
    %v332 = vld [vmem:[%s9 + $0x10] sm:$0xf]
    %v333 = vld [vmem:[%s9 + $0x14] sm:$0xf]
    %v334 = vld [vmem:[%s9 + $0x18] sm:$0xf]
    %v335 = vld [vmem:[%s9 + $0x1c] sm:$0xf]
    %v336 = vld [vmem:[%s9 + $0x20] sm:$0xf]
    %v337 = vld [vmem:[%s9 + $0x24] sm:$0xf]
    %v338 = vld [vmem:[%s9 + $0x28] sm:$0xf]
    %v339 = vld [vmem:[%s9 + $0x2c] sm:$0xf]
    %v340 = vld [vmem:[%s9 + $0x30] sm:$0xf]
    %v341 = vld [vmem:[%s9 + $0x34] sm:$0xf]
    %v342 = vld [vmem:[%s9 + $0x38] sm:$0xf]
    %v343 = vld [vmem:[%s9 + $0x3c] sm:$0xf]
    %v344 = vld [vmem:[%s10] sm:$0x1]
    %v346 = vlaneseq
    %v347 = vshrl.u32 %v346, 7
    %v348 = vsub.s32 0, %v347
    %v349 = vrot.slane %v344, %v348
    %v367 = vunpack.c.l.b16 %v328
    %v368 = vunpack.c.l.b16 %v329
    %v369 = vunpack.c.l.b16 %v330
    %v370 = vunpack.c.l.b16 %v331
    %v371 = vunpack.c.l.b16 %v332
    %v372 = vunpack.c.l.b16 %v333
    %v373 = vunpack.c.l.b16 %v334
    %v374 = vunpack.c.l.b16 %v335
    %v375 = vunpack.c.l.b16 %v336
    %v376 = vunpack.c.l.b16 %v337
    %v377 = vunpack.c.l.b16 %v338
    %v378 = vunpack.c.l.b16 %v339
    %v379 = vunpack.c.l.b16 %v340
    %v380 = vunpack.c.l.b16 %v341
    %v381 = vunpack.c.l.b16 %v342
    %v382 = vunpack.c.l.b16 %v343
    %v383 = vpack.c.b16 %v368, %v367
    %v384 = vpack.c.b16 %v370, %v369
    %v385 = vpack.c.b16 %v372, %v371
    %v386 = vpack.c.b16 %v374, %v373
    %v387 = vpack.c.b16 %v376, %v375
    %v388 = vpack.c.b16 %v378, %v377
    %v389 = vpack.c.b16 %v380, %v379
    %v390 = vpack.c.b16 %v382, %v381
    %399 = vmatprep.subr.bf16.mxu0 0
    %400 = vmatpush1.bf16.msra.mxu0 %v390
    %401 = vmatprep.subr.bf16.mxu0 0
    %402 = vmatpush1.bf16.msra.mxu0 %v389
    %403 = vmatprep.subr.bf16.mxu0 0
    %404 = vmatpush1.bf16.msra.mxu0 %v388
    %405 = vmatprep.subr.bf16.mxu0 0
    %406 = vmatpush1.bf16.msra.mxu0 %v387
    %407 = vmatprep.subr.bf16.mxu0 0
    %408 = vmatpush1.bf16.msra.mxu0 %v386
    %409 = vmatprep.subr.bf16.mxu0 0
    %410 = vmatpush1.bf16.msra.mxu0 %v385
    %411 = vmatprep.subr.bf16.mxu0 0
    %412 = vmatpush1.bf16.msra.mxu0 %v384
    %413 = vmatprep.subr.bf16.mxu0 0
    %414 = vmatpush1.bf16.msra.mxu0 %v383
    %415 = vmatprep.subr.bf16.mxu0 0
    %416 = vmatpush2.bf16.msra.mxu0 0
    %417 = vmatprep.subr.bf16.mxu0 0
    %418 = vmatpush2.bf16.msra.mxu0 0
    %419 = vmatprep.subr.bf16.mxu0 0
    %420 = vmatpush2.bf16.msra.mxu0 0
    %421 = vmatprep.subr.bf16.mxu0 0
    %422 = vmatpush2.bf16.msra.mxu0 0
    %423 = vmatprep.subr.bf16.mxu0 0
    %424 = vmatpush2.bf16.msra.mxu0 0
    %425 = vmatprep.subr.bf16.mxu0 0
    %426 = vmatpush2.bf16.msra.mxu0 0
    %427 = vmatprep.subr.bf16.mxu0 0
    %428 = vmatpush2.bf16.msra.mxu0 0
    %429 = vmatprep.subr.bf16.mxu0 0
    %430 = vmatpush2.bf16.msra.mxu0 0
    %431 = vmatprep.mubr.bf16.mxu0 0
    %432 = vmatmul.mubr.bf16.gmra.mxu0 %v327
    %v433 = vpop.f32.mrf.mxu0
    %v434 = vadd.f32 %v349, %v433
    %v435 = vpop.f32.mrf.mxu0
    %v436 = vpop.f32.mrf.mxu0
    %v437 = vpop.f32.mrf.mxu0
    %438 = vdwg.mxu0
    %439 = vst [vmem:[#allocation4] sm:$0xff] %v434
    %v440 = vld [vmem:[%s7] sm:$0xf]
    %v441 = vld [vmem:[%s7 + $0x4] sm:$0xf]
    %v442 = vld [vmem:[%s7 + $0x8] sm:$0xf]
    %v443 = vld [vmem:[%s7 + $0xc] sm:$0xf]
    %v444 = vld [vmem:[%s7 + $0x10] sm:$0xf]
    %v445 = vld [vmem:[%s7 + $0x14] sm:$0xf]
    %v446 = vld [vmem:[%s7 + $0x18] sm:$0xf]
    %v447 = vld [vmem:[%s7 + $0x1c] sm:$0xf]
    %v448 = vld [vmem:[%s7 + $0x20] sm:$0xf]
    %v449 = vld [vmem:[%s7 + $0x24] sm:$0xf]
    %v450 = vld [vmem:[%s7 + $0x28] sm:$0xf]
    %v451 = vld [vmem:[%s7 + $0x2c] sm:$0xf]
    %v452 = vld [vmem:[%s7 + $0x30] sm:$0xf]
    %v453 = vld [vmem:[%s7 + $0x34] sm:$0xf]
    %v454 = vld [vmem:[%s7 + $0x38] sm:$0xf]
    %v455 = vld [vmem:[%s7 + $0x3c] sm:$0xf]
    %v456 = vld [vmem:[%s8] sm:$0x1]
    %v458 = vlaneseq
    %v459 = vshrl.u32 %v458, 7
    %v460 = vsub.s32 0, %v459
    %v461 = vrot.slane %v456, %v460
    %v479 = vunpack.c.l.b16 %v440
    %v480 = vunpack.c.l.b16 %v441
    %v481 = vunpack.c.l.b16 %v442
    %v482 = vunpack.c.l.b16 %v443
    %v483 = vunpack.c.l.b16 %v444
    %v484 = vunpack.c.l.b16 %v445
    %v485 = vunpack.c.l.b16 %v446
    %v486 = vunpack.c.l.b16 %v447
    %v487 = vunpack.c.l.b16 %v448
    %v488 = vunpack.c.l.b16 %v449
    %v489 = vunpack.c.l.b16 %v450
    %v490 = vunpack.c.l.b16 %v451
    %v491 = vunpack.c.l.b16 %v452
    %v492 = vunpack.c.l.b16 %v453
    %v493 = vunpack.c.l.b16 %v454
    %v494 = vunpack.c.l.b16 %v455
    %v495 = vpack.c.b16 %v480, %v479
    %v496 = vpack.c.b16 %v482, %v481
    %v497 = vpack.c.b16 %v484, %v483
    %v498 = vpack.c.b16 %v486, %v485
    %v499 = vpack.c.b16 %v488, %v487
    %v500 = vpack.c.b16 %v490, %v489
    %v501 = vpack.c.b16 %v492, %v491
    %v502 = vpack.c.b16 %v494, %v493
    %511 = vmatprep.subr.bf16.mxu0 0
    %512 = vmatpush1.bf16.msra.mxu0 %v502
    %513 = vmatprep.subr.bf16.mxu0 0
    %514 = vmatpush1.bf16.msra.mxu0 %v501
    %515 = vmatprep.subr.bf16.mxu0 0
    %516 = vmatpush1.bf16.msra.mxu0 %v500
    %517 = vmatprep.subr.bf16.mxu0 0
    %518 = vmatpush1.bf16.msra.mxu0 %v499
    %519 = vmatprep.subr.bf16.mxu0 0
    %520 = vmatpush1.bf16.msra.mxu0 %v498
    %521 = vmatprep.subr.bf16.mxu0 0
    %522 = vmatpush1.bf16.msra.mxu0 %v497
    %523 = vmatprep.subr.bf16.mxu0 0
    %524 = vmatpush1.bf16.msra.mxu0 %v496
    %525 = vmatprep.subr.bf16.mxu0 0
    %526 = vmatpush1.bf16.msra.mxu0 %v495
    %527 = vmatprep.subr.bf16.mxu0 0
    %528 = vmatpush2.bf16.msra.mxu0 0
    %529 = vmatprep.subr.bf16.mxu0 0
    %530 = vmatpush2.bf16.msra.mxu0 0
    %531 = vmatprep.subr.bf16.mxu0 0
    %532 = vmatpush2.bf16.msra.mxu0 0
    %533 = vmatprep.subr.bf16.mxu0 0
    %534 = vmatpush2.bf16.msra.mxu0 0
    %535 = vmatprep.subr.bf16.mxu0 0
    %536 = vmatpush2.bf16.msra.mxu0 0
    %537 = vmatprep.subr.bf16.mxu0 0
    %538 = vmatpush2.bf16.msra.mxu0 0
    %539 = vmatprep.subr.bf16.mxu0 0
    %540 = vmatpush2.bf16.msra.mxu0 0
    %541 = vmatprep.subr.bf16.mxu0 0
    %542 = vmatpush2.bf16.msra.mxu0 0
    %543 = vmatprep.mubr.bf16.mxu0 0
    %544 = vmatmul.mubr.bf16.gmra.mxu0 %v327
    %v545 = vpop.f32.mrf.mxu0
    %v546 = vadd.f32 %v461, %v545
    %v547 = vpop.f32.mrf.mxu0
    %v548 = vpop.f32.mrf.mxu0
    %v549 = vpop.f32.mrf.mxu0
    %550 = vdwg.mxu0
    %551 = vmax.xlane.f32.xlu0 %v546
    %v552 = vpop.xlane.xlu0 %551
    %v553 = vsub.f32 %v546, %v552
    %v554 = vmul.f32 %v553, 1.442695
    %v555 = vpow.pop %v554
    %556 = vst [vmem:[#allocation2] sm:$0xff] %v555
    %v557 = vld [vmem:[#allocation2] sm:$0xff]
    %558 = vadd.xlane.f32.xlu0 %v557
    %v559 = vpop.xlane.xlu0 %558
    %v560 = vrcp.pop %v559
    %v561 = vmul.f32 %v557, %v560
    %562 = vst [vmem:[#allocation2] sm:$0xff] %v561
    // Predicated region
    $region46: #{zinb_decoder.1} parent=1 // pred_check
      _
    $region47: #{zinb_decoder.1} parent=1 // pred_check_branch
      %564 = sbr.rel (0) target = $region49
    $region48: #{zinb_decoder.1} parent=1 // pred_region
      %s566 = ssub.s32 128, 128
      %567 = vsyncadd [#allocation3], %s566
      %s569 = sshll.u32 [#allocation2], 4
      %s570 = int_to_ptr.vmem [resolvable:$true] %s569
      %572 = dma.vmem_to_hbm [thread:$0]  %s570, 128, %s11, [#allocation3]
    $region49: #{zinb_decoder.1} parent=1 // pred_fallthru
      _
    // Predicated region
    $region50: #{zinb_decoder.1} parent=1 // pred_check
      _
    $region51: #{zinb_decoder.1} parent=1 // pred_check_branch
      %574 = sbr.rel (0) target = $region53
    $region52: #{zinb_decoder.1} parent=1 // pred_region
      %s576 = ssub.s32 128, 128
      %577 = vsyncadd [#allocation5], %s576
      %s579 = sshll.u32 [#allocation4], 4
      %s580 = int_to_ptr.vmem [resolvable:$true] %s579
      %582 = dma.vmem_to_hbm [thread:$0]  %s580, 128, %s12, [#allocation5]
    $region53: #{zinb_decoder.1} parent=1 // pred_fallthru
      _
    // Predicated region
    $region54: #{zinb_decoder.1} parent=1 // pred_check
      _
    $region55: #{zinb_decoder.1} parent=1 // pred_check_branch
      %584 = sbr.rel (0) target = $region57
    $region56: #{zinb_decoder.1} parent=1 // pred_region
      %585 = dma.done [#allocation3], 128
    $region57: #{zinb_decoder.1} parent=1 // pred_fallthru
      _
    // Predicated region
    $region58: #{zinb_decoder.1} parent=1 // pred_check
      _
    $region59: #{zinb_decoder.1} parent=1 // pred_check_branch
      %587 = sbr.rel (0) target = $region61
    $region60: #{zinb_decoder.1} parent=1 // pred_region
      %588 = dma.done [#allocation5], 128
    $region61: #{zinb_decoder.1} parent=1 // pred_fallthru
      _
    %589 = vsyncpa [#allocation3], 1
    %590 = vsyncpa [#allocation5], 1

</llo_original>
